<compile_context>
chip_gen: v7x
topology: tpu7x:2x2x1
jax: 0.10.0
libtpu: 0.0.40
codegen_flags: <defaults>
</compile_context>

<pallas_src>
import functools

import jax
import jax.numpy as jnp
from jax.experimental import pallas as pl
from jax.experimental.pallas import tpu as pltpu


def _proj_sum_kernel(x_ref, w_ref, b_ref, o_ref, *, use_bias: bool):
    """Single fused projection-sum.

    x_ref: (Vt, T*M)  rows = vocab slots, columns = all terms' features
    w_ref: (T*M, M)   row-stack of W_i^T (contraction already aligned)
    b_ref: (1, M)     pre-summed bias (sum over terms)
    o_ref: (Vt, M)    output tile
    """
    y = jnp.dot(x_ref[...], w_ref[...], preferred_element_type=jnp.float32)
    if use_bias:
        y = y + b_ref[...]
    o_ref[...] = y.astype(o_ref.dtype)


def projection_sum_compose(
    args, weights, biases, *, vocab_size, msg_len, bias, v_tile=512
):
    """JAX wrapper reproducing ProjectionSumCompose.forward.

    args:    list/tuple of num_terms flat tensors, each of size vocab_size*msg_len.
    weights: (num_terms, msg_len, msg_len) float32  (PyTorch Linear W[out, in])
    biases:  (num_terms, msg_len) float32
    Returns: (1, vocab_size * msg_len) float32
    """
    num_terms = len(args)
    k_dim = num_terms * msg_len

    # x laid out as (V, T*M): term i occupies columns [i*M, (i+1)*M).
    x2d = jnp.concatenate(
        [jnp.asarray(a, jnp.float32).reshape(vocab_size, msg_len) for a in args],
        axis=1,
    )  # (V, T*M)

    # Row-stack of W_i^T -> contraction over T*M gives sum_i x_i @ W_i^T.
    w = jnp.asarray(weights, jnp.float32).reshape(num_terms, msg_len, msg_len)
    wk = jnp.swapaxes(w, 1, 2).reshape(k_dim, msg_len)  # (T*M, M), transposed once

    # Pre-summed bias (each term adds its own bias before summing => sum of biases).
    b = jnp.asarray(biases, jnp.float32).reshape(num_terms, msg_len)
    b_sum = jnp.sum(b, axis=0, keepdims=True)  # (1, M)

    kernel = functools.partial(_proj_sum_kernel, use_bias=bias)

    flops = 2 * vocab_size * k_dim * msg_len
    bytes_accessed = 4 * (
        vocab_size * k_dim + k_dim * msg_len + msg_len + vocab_size * msg_len
    )
    cost = pl.CostEstimate(
        flops=flops, transcendentals=0, bytes_accessed=bytes_accessed
    )

    out_shape = jax.ShapeDtypeStruct((vocab_size, msg_len), jnp.float32)

    use_tiled = (
        vocab_size > v_tile and vocab_size % v_tile == 0 and v_tile % 8 == 0
    )

    if not use_tiled:
        # Tiny / non-divisible shapes: gridless single-shot kernel
        # (whole operands resident in VMEM, one MXU pass, one store).
        out = pl.pallas_call(
            kernel,
            out_shape=out_shape,
            cost_estimate=cost,
        )(x2d, wk, b_sum)
    else:
        # Large vocab: tile V with a "parallel" axis (megacore on v7x),
        # weights/bias broadcast to every tile, K reduction fully inside
        # the single jnp.dot (no 'arbitrary' axis needed).
        out = pl.pallas_call(
            kernel,
            out_shape=out_shape,
            grid_spec=pltpu.PrefetchScalarGridSpec(
                num_scalar_prefetch=0,
                grid=(vocab_size // v_tile,),
                in_specs=[
                    pl.BlockSpec((v_tile, k_dim), lambda i: (i, 0)),
                    pl.BlockSpec((k_dim, msg_len), lambda i: (0, 0)),
                    pl.BlockSpec((1, msg_len), lambda i: (0, 0)),
                ],
                out_specs=pl.BlockSpec((v_tile, msg_len), lambda i: (i, 0)),
            ),
            compiler_params=pltpu.CompilerParams(
                dimension_semantics=("parallel",),
                vmem_limit_bytes=32 * 1024 * 1024,  # safe for v7x's smaller VMEM
            ),
            cost_estimate=cost,
        )(x2d, wk, b_sum)

    # Lane-dense flatten done on the XLA side (matches the PyTorch .view).
    return out.reshape(1, vocab_size * msg_len)


def _reference(args, weights, biases, *, vocab_size, msg_len, bias):
    """Pure-JAX reference mirroring the PyTorch forward exactly."""
    outs = []
    for i, a in enumerate(args):
        xi = jnp.asarray(a, jnp.float32).reshape(1, vocab_size, msg_len)
        yi = jnp.einsum("bvm,nm->bvn", xi, weights[i])  # x @ W^T (nn.Linear)
        if bias:
            yi = yi + biases[i]
        outs.append(yi)
    y = jnp.stack(outs, axis=0).sum(axis=0)
    return y.reshape(1, vocab_size * msg_len)


if __name__ == "__main__":
    # Small shapes consistent with the module.
    num_terms = 3
    vocab_size = 8
    msg_len = 16
    use_bias = True

    key = jax.random.PRNGKey(0)
    k_x, k_w, k_b = jax.random.split(key, 3)

    # num_terms flat input vectors of size vocab_size * msg_len
    xs_flat = jax.random.normal(
        k_x, (num_terms, vocab_size * msg_len), dtype=jnp.float32
    )
    args = [xs_flat[i] for i in range(num_terms)]

    # Deterministic parameter init (nn.Linear shapes: W (M, M), b (M,))
    weights = 0.1 * jax.random.normal(
        k_w, (num_terms, msg_len, msg_len), dtype=jnp.float32
    )
    biases = 0.1 * jax.random.normal(k_b, (num_terms, msg_len), dtype=jnp.float32)

    out = projection_sum_compose(
        args, weights, biases, vocab_size=vocab_size, msg_len=msg_len, bias=use_bias
    )
    out = jax.block_until_ready(out)

    ref = _reference(
        args, weights, biases, vocab_size=vocab_size, msg_len=msg_len, bias=use_bias
    )
    assert out.shape == (1, vocab_size * msg_len)
    assert jnp.allclose(out, ref, atol=1e-5, rtol=1e-5), "mismatch vs reference"

    print("KERNEL_OK")
</pallas_src>

<mosaic_0001>
module attributes {stable_mosaic.version = 11 : i64} {
  func.func @_proj_sum_kernel(%arg0: memref<8x48xf32, #tpu.memory_space<vmem>>, %arg1: memref<48x16xf32, #tpu.memory_space<vmem>>, %arg2: memref<1x16xf32, #tpu.memory_space<vmem>>, %arg3: memref<8x16xf32, #tpu.memory_space<vmem>>) attributes {dimension_semantics = [], scalar_prefetch = 0 : i64, scratch_operands = 0 : i64, tpu.core_type = #tpu.core_type<tc>} {
    %c0 = arith.constant 0 : index
    %c0_0 = arith.constant 0 : index
    %0 = vector.load %arg0[%c0, %c0_0] : memref<8x48xf32, #tpu.memory_space<vmem>>, vector<8x48xf32>
    %c0_1 = arith.constant 0 : index
    %c0_2 = arith.constant 0 : index
    %1 = vector.load %arg1[%c0_1, %c0_2] : memref<48x16xf32, #tpu.memory_space<vmem>>, vector<48x16xf32>
    %cst = arith.constant dense<0.000000e+00> : vector<8x16xf32>
    %2 = tpu.matmul %0, %1, %cst {dimension_numbers = #tpu.dot_dimension_numbers<[1], [0], [0], [1], [0, 0, 1, 1], [], []>} : vector<8x48xf32>, vector<48x16xf32>, vector<8x16xf32> -> vector<8x16xf32>
    %c0_3 = arith.constant 0 : index
    %c0_4 = arith.constant 0 : index
    %3 = vector.load %arg2[%c0_3, %c0_4] : memref<1x16xf32, #tpu.memory_space<vmem>>, vector<1x16xf32>
    %4 = vector.broadcast %3 : vector<1x16xf32> to vector<8x16xf32>
    %5 = arith.addf %2, %4 : vector<8x16xf32>
    %c0_5 = arith.constant 0 : index
    %c0_6 = arith.constant 0 : index
    %6 = vector.load %arg3[%c0_5, %c0_6] : memref<8x16xf32, #tpu.memory_space<vmem>>, vector<8x16xf32>
    tpu.vector_store %arg3[%c0_5, %c0_6], %5 {strides = array<i32>} : memref<8x16xf32, #tpu.memory_space<vmem>>, vector<8x16xf32>,
    return
  }
}

</mosaic_0001>

<llo_original>
// kernel: tpu_custom_call.1
$region0: #{tpu_custom_call.1}
  #allocation0 [shape = 'u32[]', space=smem, size = 0x4, offset = 0x4, fixed_abs, tag = 'smem constant byte address 0x4 - core index']
  #allocation1 [shape = 'u32[144,128]{1,0:T(1,128)}', space=vmem, size = 0x12000, scoped, tag = 'internal scratch']
  %s0 = inlined_call_operand.vmem [shape: f32[8,48], index: 0, kind: input, shape index: {}]
  %s1 = inlined_call_operand.vmem [shape: f32[48,16], index: 1, kind: input, shape index: {}]
  %s2 = inlined_call_operand.vmem [shape: f32[1,16], index: 2, kind: input, shape index: {}]
  %s3 = inlined_call_operand.hbm [shape: f32[8,16], index: 3, kind: output, shape index: {}]
  %s4 = sld [smem:[#allocation0]]
  $region22: #{tpu_custom_call.1} parent=0
    _
  %s6 = ssub.s32 1, %s4
  %s7 = scalar_select 0, %s6, %s4
  $region1: #{tpu_custom_call.1} parent=0
    #allocation2 [shape = 'u8[4096]{0}', space=vmem, size = 0x1000, scoped, tag = 'output window, operand 0, single buffered']
    #allocation3 [shape = 's32[1]{0}', space=sflag, size = 0x4, scoped, tag = 'scoped memory for tpu_custom_call.1']
    %8 = vsyncpa [#allocation3], 0
    // Predicated region
    $region2: #{tpu_custom_call.1} parent=1 // pred_check
      _
    $region3: #{tpu_custom_call.1} parent=1 // pred_check_branch
      %10 = sbr.rel (0) target = $region5
    $region4: #{tpu_custom_call.1} parent=1 // pred_region
      _
    $region5: #{tpu_custom_call.1} parent=1 // pred_fallthru
      _
    // Predicated region
    $region6: #{tpu_custom_call.1} parent=1 // pred_check
      _
    $region7: #{tpu_custom_call.1} parent=1 // pred_check_branch
      %12 = sbr.rel (0) target = $region9
    $region8: #{tpu_custom_call.1} parent=1 // pred_region
      _
    $region9: #{tpu_custom_call.1} parent=1 // pred_fallthru
      _
    // Predicated region
    $region10: #{tpu_custom_call.1} parent=1 // pred_check
      _
    $region11: #{tpu_custom_call.1} parent=1 // pred_check_branch
      %14 = sbr.rel (0) target = $region13
    $region12: #{tpu_custom_call.1} parent=1 // pred_region
      _
    $region13: #{tpu_custom_call.1} parent=1 // pred_fallthru
      _
    %v15 = vld [vmem:[%s0] sm:$0xff]
    %v16 = vld [vmem:[%s1] sm:$0xff]
    %v17 = vld [vmem:[%s1 + $0x8] sm:$0xff]
    %v18 = vld [vmem:[%s1 + $0x10] sm:$0xff]
    %v19 = vld [vmem:[%s1 + $0x18] sm:$0xff]
    %v20 = vld [vmem:[%s1 + $0x20] sm:$0xff]
    %v21 = vld [vmem:[%s1 + $0x28] sm:$0xff]
    %v22 = vld [vmem:[%s2] sm:$0x1]
    %v24 = vlaneseq
    %v25 = vshrl.u32 %v24, 7
    %v26 = vsub.s32 0, %v25
    %v27 = vrot.slane %v22, %v26
    %vm29 = vcmask 392192
    %v31 = vsel %vm29, %v15, 0
    %33 = vmatprep.subr.mxu0 0.0
    %34 = vmatpush1.msra.mxu0 %v16
    %35 = vmatprep.subr.mxu0 0.0
    %36 = vmatpush1.msra.mxu0 %v17
    %37 = vmatprep.subr.mxu0 0.0
    %38 = vmatpush1.msra.mxu0 %v18
    %39 = vmatprep.subr.mxu0 0.0
    %40 = vmatpush1.msra.mxu0 %v19
    %41 = vmatprep.subr.mxu0 0.0
    %42 = vmatpush1.msra.mxu0 %v20
    %43 = vmatprep.subr.mxu0 0.0
    %44 = vmatpush1.msra.mxu0 %v21
    %45 = vmatprep.subr.mxu0 0.0
    %46 = vmatpush1.msra.mxu0 0.0
    %47 = vmatprep.subr.mxu0 0.0
    %48 = vmatpush1.msra.mxu0 0.0
    %49 = vmatprep.subr.mxu0 0.0
    %50 = vmatpush1.msra.mxu0 0.0
    %51 = vmatprep.subr.mxu0 0.0
    %52 = vmatpush1.msra.mxu0 0.0
    %53 = vmatprep.subr.mxu0 0.0
    %54 = vmatpush1.msra.mxu0 0.0
    %55 = vmatprep.subr.mxu0 0.0
    %56 = vmatpush1.msra.mxu0 0.0
    %57 = vmatprep.subr.mxu0 0.0
    %58 = vmatpush1.msra.mxu0 0.0
    %59 = vmatprep.subr.mxu0 0.0
    %60 = vmatpush1.msra.mxu0 0.0
    %61 = vmatprep.subr.mxu0 0.0
    %62 = vmatpush1.msra.mxu0 0.0
    %63 = vmatprep.subr.mxu0 0.0
    %64 = vmatpush1.msra.mxu0 0.0
    %65 = vmatprep.subr.mxu0 0.0
    %66 = vmatpush1.msra.mxu0 0.0
    %67 = vmatprep.subr.mxu0 0.0
    %68 = vmatpush1.msra.mxu0 0.0
    %69 = vmatprep.subr.mxu0 0.0
    %70 = vmatpush1.msra.mxu0 0.0
    %71 = vmatprep.subr.mxu0 0.0
    %72 = vmatpush1.msra.mxu0 0.0
    %73 = vmatprep.subr.mxu0 0.0
    %74 = vmatpush1.msra.mxu0 0.0
    %75 = vmatprep.subr.mxu0 0.0
    %76 = vmatpush1.msra.mxu0 0.0
    %77 = vmatprep.subr.mxu0 0.0
    %78 = vmatpush1.msra.mxu0 0.0
    %79 = vmatprep.subr.mxu0 0.0
    %80 = vmatpush1.msra.mxu0 0.0
    %81 = vmatprep.subr.mxu0 0.0
    %82 = vmatpush1.msra.mxu0 0.0
    %83 = vmatprep.subr.mxu0 0.0
    %84 = vmatpush1.msra.mxu0 0.0
    %85 = vmatprep.subr.mxu0 0.0
    %86 = vmatpush1.msra.mxu0 0.0
    %87 = vmatprep.subr.mxu0 0.0
    %88 = vmatpush1.msra.mxu0 0.0
    %89 = vmatprep.subr.mxu0 0.0
    %90 = vmatpush1.msra.mxu0 0.0
    %91 = vmatprep.subr.mxu0 0.0
    %92 = vmatpush1.msra.mxu0 0.0
    %93 = vmatprep.subr.mxu0 0.0
    %94 = vmatpush1.msra.mxu0 0.0
    %95 = vmatprep.subr.mxu0 0.0
    %96 = vmatpush1.msra.mxu0 0.0
    %97 = vmatprep.mubr.f32.mxu0 0.0
    %98 = vmatmul.mubr.f32.gmra.mrb[0].mxu0 %v31
    %v99 = vpop.f32.mrb[0].mxu0
    %v100 = vadd.f32 %v27, %v99
    %v101 = vpop.f32.mrb[0].mxu0
    %102 = vdwg.mxu0
    %vm103 = vcmask 130048
    %104 = vst.msk [vmem:[#allocation2] sm:$0xff] %vm103, %v100
    // Predicated region
    $region14: #{tpu_custom_call.1} parent=1 // pred_check
      _
    $region15: #{tpu_custom_call.1} parent=1 // pred_check_branch
      %106 = sbr.rel (0) target = $region17
    $region16: #{tpu_custom_call.1} parent=1 // pred_region
      %s108 = ssub.s32 128, 128
      %109 = vsyncadd [#allocation3], %s108
      %s111 = sshll.u32 [#allocation2], 4
      %s112 = int_to_ptr.vmem [resolvable:$true] %s111
      %114 = dma.vmem_to_hbm [thread:$0]  %s112, 128, %s3, [#allocation3]
    $region17: #{tpu_custom_call.1} parent=1 // pred_fallthru
      _
    // Predicated region
    $region18: #{tpu_custom_call.1} parent=1 // pred_check
      _
    $region19: #{tpu_custom_call.1} parent=1 // pred_check_branch
      %116 = sbr.rel (0) target = $region21
    $region20: #{tpu_custom_call.1} parent=1 // pred_region
      %117 = dma.done [#allocation3], 128
    $region21: #{tpu_custom_call.1} parent=1 // pred_fallthru
      _
    %118 = vsyncpa [#allocation3], 1

</llo_original>
